<compile_context>
chip_gen: v5e
topology: v5e:2x2
jax: 0.10.0
libtpu: 0.0.40
codegen_flags: <defaults>
</compile_context>

<pallas_src>
import functools

import jax
import jax.numpy as jnp
from jax.experimental import pallas as pl
from jax.experimental.pallas import tpu as pltpu

EPS = 1e-8


def _round_up(x: int, m: int) -> int:
    return ((x + m - 1) // m) * m


def _encoder_kernel(inv_ref, w_ref, xm_ref, xh_ref, out_ref):
    """One grid step = (batch element b, K-tile kt).

    inv_ref : (B,) SMEM           per-batch 1/(||x||_2 + EPS)
    w_ref   : (LQ, 2N, stride)    fused+padded conv taps, resident, bf16
    xm_ref  : (1, stride, TK)     xt slab for this K tile (non-overlapping)
    xh_ref  : (1, stride, 128)    halo: next 128 xt columns (for shifted views)
    out_ref : (1, N, TK)          gated encoding, lane-dense [B, N, K_pad]
    """
    lq, two_n, _ = w_ref.shape
    n = two_n // 2
    tk = xm_ref.shape[-1]
    cdt = w_ref.dtype

    inv = inv_ref[pl.program_id(0)]                       # SMEM scalar read

    if lq > 1:
        # (stride, TK + 128): main slab + halo so all LQ shifted views exist.
        slab = jnp.concatenate([xm_ref[0], xh_ref[0]], axis=-1)
    else:
        slab = xm_ref[0]
    slab = slab * inv                                     # f32 normalize

    # frames[q*stride + r, k] = x_norm[(k0 + k + q)*stride + r] = slab[r, k+q]
    # -> sum over q of (2N, stride) @ (stride, TK) MXU matmuls, f32 accumulate.
    acc = jnp.dot(w_ref[0], slab[:, :tk].astype(cdt),
                  preferred_element_type=jnp.float32)
    for q in range(1, lq):
        acc += jnp.dot(w_ref[q], slab[:, q:q + tk].astype(cdt),
                       preferred_element_type=jnp.float32)

    u = acc[:n]                                           # relu path
    v = acc[n:]                                           # sigmoid path
    out_ref[0] = (jax.nn.relu(u) * jax.nn.sigmoid(v)).astype(out_ref.dtype)


@functools.partial(jax.jit, static_argnames=("L", "stride", "compute_dtype"))
def encoder_forward(mixture, w_u, w_v, *, L, stride, compute_dtype=jnp.bfloat16):
    """mixture: [B, 1, T] f32; w_u/w_v: [N, 1, L] (PyTorch Conv1d layout).

    Returns (mixture_weights [B, N, K] f32, norm_coef [B, 1, 1] f32).
    """
    B, _, T = mixture.shape
    N = w_u.shape[0]
    K = (T - L) // stride + 1
    LQ = -(-L // stride)                                   # ceil(L / stride)

    x = mixture[:, 0, :]                                   # [B, T]

    # Per-batch L2 norm / scale computed once in the wrapper (tiny reduction).
    norms = jnp.sqrt(jnp.sum(x * x, axis=1))               # [B]
    inv = (1.0 / (norms + EPS)).astype(jnp.float32)        # [B], goes to SMEM

    # ---- lane tile TK: big, 128-aligned, >= 2 kt tiles when B == 1 --------
    max_tk = 1024   # keeps (N, TK) f32 out tile double-buffered < 16 MiB (v5e)
    if B >= 2:
        TK = min(max_tk, _round_up(K, 128))
    else:
        TK = min(max_tk, max(128, _round_up(-(-K // 2), 128)))
    K_pad = _round_up(K, TK)
    n_kt = K_pad // TK

    # ---- xt[b, r, j] = x[b, j*stride + r] for j in [0, K_pad + 128) --------
    # (tiny: ~|x| bytes; replaces the old [B, L, K] frame materialization)
    xtp = K_pad + 128                                      # +128-column halo
    t_need = xtp * stride
    if t_need >= T:
        x_proc = jnp.pad(x, ((0, 0), (0, t_need - T)))
    else:
        x_proc = x[:, :t_need]
    xt = x_proc.reshape(B, xtp, stride).transpose(0, 2, 1)  # [B, stride, xtp]

    # ---- fused taps: w3[q, :, r] = [W_U; W_V][:, q*stride + r] (zero-padded)
    w_fused = jnp.concatenate([w_u[:, 0, :], w_v[:, 0, :]], axis=0)   # [2N, L]
    w_fused = jnp.pad(w_fused, ((0, 0), (0, LQ * stride - L)))
    w3 = w_fused.reshape(2 * N, LQ, stride).transpose(1, 0, 2)        # [LQ,2N,stride]
    w3 = w3.astype(compute_dtype)

    halo_blocks = TK // 128

    out = pl.pallas_call(
        _encoder_kernel,
        out_shape=jax.ShapeDtypeStruct((B, N, K_pad), jnp.float32),
        grid_spec=pltpu.PrefetchScalarGridSpec(
            num_scalar_prefetch=0,
            grid=(B, n_kt),
            in_specs=[
                # per-batch scale, whole array in SMEM (scalar-unit reads)
                pl.BlockSpec(memory_space=pltpu.MemorySpace.SMEM),
                # fused conv taps, resident across the grid
                pl.BlockSpec((LQ, 2 * N, stride), lambda b, kt: (0, 0, 0)),
                # main xt slab for this K tile
                pl.BlockSpec((1, stride, TK), lambda b, kt: (b, 0, kt)),
                # 128-column halo right after the slab
                pl.BlockSpec((1, stride, 128),
                             lambda b, kt: (b, 0, (kt + 1) * halo_blocks)),
            ],
            out_specs=pl.BlockSpec((1, N, TK), lambda b, kt: (b, 0, kt)),
        ),
        compiler_params=pltpu.CompilerParams(
            dimension_semantics=("parallel", "parallel"),
        ),
    )(inv, w3, xt, xt)

    mixture_weights = out[:, :, :K]                        # drop lane padding
    norm_coef = norms.reshape(B, 1, 1)                     # [B, 1, 1]
    return mixture_weights, norm_coef


def _reference(mixture, w_u, w_v, *, L, stride):
    """Pure-JAX reference mirroring the PyTorch Encoder forward (f32)."""
    B, _, T = mixture.shape
    K = (T - L) // stride + 1
    norm_coef = jnp.linalg.norm(mixture, axis=2, keepdims=True)      # [B,1,1]
    x_norm = mixture / (norm_coef + EPS)
    idx = jnp.arange(K)[:, None] * stride + jnp.arange(L)[None, :]
    seg = x_norm[:, 0, :][:, idx]                                    # [B,K,L]
    u = jnp.einsum("bkl,nl->bnk", seg, w_u[:, 0, :])
    v = jnp.einsum("bkl,nl->bnk", seg, w_v[:, 0, :])
    return jax.nn.relu(u) * jax.nn.sigmoid(v), norm_coef


if __name__ == "__main__":
    B, T = 2, 64
    N, L, stride = 32, 8, 4

    key = jax.random.PRNGKey(0)
    k1, k2, k3 = jax.random.split(key, 3)
    mixture = jax.random.normal(k1, (B, 1, T), dtype=jnp.float32)
    # Conv1d-shaped weights: (out_channels=N, in_channels=1, kernel=L).
    bound = 1.0 / (L ** 0.5)   # kaiming-uniform-like scale for fan_in = L
    w_u = jax.random.uniform(k2, (N, 1, L), jnp.float32, -bound, bound)
    w_v = jax.random.uniform(k3, (N, 1, L), jnp.float32, -bound, bound)

    weights, norm_coef = encoder_forward(mixture, w_u, w_v, L=L, stride=stride)
    jax.block_until_ready((weights, norm_coef))

    ref_w, ref_n = _reference(mixture, w_u, w_v, L=L, stride=stride)
    K = (T - L) // stride + 1
    assert weights.shape == (B, N, K)
    assert norm_coef.shape == (B, 1, 1)
    # bf16 MXU operands (f32 accumulation) -> intentionally loosened tolerance
    # vs the f32 reference; structural/indexing bugs would exceed this by >>10x.
    max_err = float(jnp.max(jnp.abs(weights - ref_w)))
    assert jnp.allclose(weights, ref_w, atol=5e-3, rtol=5e-2), max_err
    assert jnp.allclose(norm_coef, ref_n, atol=1e-4, rtol=1e-5)

    print("KERNEL_OK")
</pallas_src>

<mosaic_0001>
module attributes {stable_mosaic.version = 11 : i64} {
  func.func @_encoder_kernel(%arg0: i32, %arg1: i32, %arg2: memref<2xf32, #tpu.memory_space<smem>>, %arg3: memref<2x64x4xbf16, #tpu.memory_space<vmem>>, %arg4: memref<1x4x128xf32, #tpu.memory_space<vmem>>, %arg5: memref<1x4x128xf32, #tpu.memory_space<vmem>>, %arg6: memref<1x32x128xf32, #tpu.memory_space<vmem>>) attributes {dimension_semantics = [#tpu.dimension_semantics<parallel>, #tpu.dimension_semantics<parallel>], iteration_bounds = array<i64: 2, 1>, scalar_prefetch = 0 : i64, scratch_operands = 0 : i64, tpu.core_type = #tpu.core_type<tc>, window_params = [{transform_indices = @transform_0, window_bounds = array<i64: 2>}, {pipeline_mode = #tpu.pipeline_mode<synchronous>, transform_indices = @transform_1, window_bounds = array<i64: 2, 64, 4>}, {transform_indices = @transform_2, window_bounds = array<i64: 1, 4, 128>}, {transform_indices = @transform_3, window_bounds = array<i64: 1, 4, 128>}, {transform_indices = @transform_4, window_bounds = array<i64: 1, 32, 128>}]} {
    %0 = arith.index_cast %arg0 : i32 to index
    %1 = memref.load %arg2[%0] : memref<2xf32, #tpu.memory_space<smem>>
    %c0 = arith.constant 0 : index
    %c0_0 = arith.constant 0 : index
    %c0_1 = arith.constant 0 : index
    %2 = vector.load %arg4[%c0, %c0_0, %c0_1] : memref<1x4x128xf32, #tpu.memory_space<vmem>>, vector<1x4x128xf32>
    %3 = vector.shape_cast %2 : vector<1x4x128xf32> to vector<4x128xf32>
    %c0_2 = arith.constant 0 : index
    %c0_3 = arith.constant 0 : index
    %c0_4 = arith.constant 0 : index
    %4 = vector.load %arg5[%c0_2, %c0_3, %c0_4] : memref<1x4x128xf32, #tpu.memory_space<vmem>>, vector<1x4x128xf32>
    %5 = vector.shape_cast %4 : vector<1x4x128xf32> to vector<4x128xf32>
    %6 = tpu.concatenate %3, %5 in 1 : vector<4x128xf32>, vector<4x128xf32> -> vector<4x256xf32>
    %7 = vector.broadcast %1 : f32 to vector<4x256xf32>
    %8 = arith.mulf %6, %7 : vector<4x256xf32>
    %c0_5 = arith.constant 0 : index
    %c0_6 = arith.constant 0 : index
    %c0_7 = arith.constant 0 : index
    %9 = vector.load %arg3[%c0_5, %c0_6, %c0_7] : memref<2x64x4xbf16, #tpu.memory_space<vmem>>, vector<1x64x4xbf16>
    %10 = vector.shape_cast %9 : vector<1x64x4xbf16> to vector<64x4xbf16>
    %11 = vector.extract_strided_slice %8 {offsets = [0, 0], sizes = [4, 128], strides = [1, 1]} : vector<4x256xf32> to vector<4x128xf32>
    %12 = arith.truncf %11 : vector<4x128xf32> to vector<4x128xbf16>
    %cst = arith.constant dense<0.000000e+00> : vector<64x128xf32>
    %13 = tpu.matmul %10, %12, %cst {dimension_numbers = #tpu.dot_dimension_numbers<[1], [0], [0], [1], [0, 0, 1, 1], [], []>} : vector<64x4xbf16>, vector<4x128xbf16>, vector<64x128xf32> -> vector<64x128xf32>
    %c1 = arith.constant 1 : index
    %c0_8 = arith.constant 0 : index
    %c0_9 = arith.constant 0 : index
    %14 = vector.load %arg3[%c1, %c0_8, %c0_9] : memref<2x64x4xbf16, #tpu.memory_space<vmem>>, vector<1x64x4xbf16>
    %15 = vector.shape_cast %14 : vector<1x64x4xbf16> to vector<64x4xbf16>
    %16 = vector.extract_strided_slice %8 {offsets = [0, 1], sizes = [4, 128], strides = [1, 1]} : vector<4x256xf32> to vector<4x128xf32>
    %17 = arith.truncf %16 : vector<4x128xf32> to vector<4x128xbf16>
    %cst_10 = arith.constant dense<0.000000e+00> : vector<64x128xf32>
    %18 = tpu.matmul %15, %17, %cst_10 {dimension_numbers = #tpu.dot_dimension_numbers<[1], [0], [0], [1], [0, 0, 1, 1], [], []>} : vector<64x4xbf16>, vector<4x128xbf16>, vector<64x128xf32> -> vector<64x128xf32>
    %19 = arith.addf %13, %18 : vector<64x128xf32>
    %20 = vector.extract_strided_slice %19 {offsets = [0, 0], sizes = [32, 128], strides = [1, 1]} : vector<64x128xf32> to vector<32x128xf32>
    %21 = vector.extract_strided_slice %19 {offsets = [32, 0], sizes = [32, 128], strides = [1, 1]} : vector<64x128xf32> to vector<32x128xf32>
    %cst_11 = arith.constant 0.000000e+00 : f32
    %22 = vector.broadcast %cst_11 : f32 to vector<32x128xf32>
    %23 = arith.maximumf %20, %22 : vector<32x128xf32>
    %24 = arith.negf %21 : vector<32x128xf32>
    %25 = math.exp %24 : vector<32x128xf32>
    %cst_12 = arith.constant 1.000000e+00 : f32
    %26 = vector.broadcast %cst_12 : f32 to vector<32x128xf32>
    %27 = arith.addf %26, %25 : vector<32x128xf32>
    %28 = arith.divf %26, %27 : vector<32x128xf32>
    %29 = arith.mulf %23, %28 : vector<32x128xf32>
    %c0_13 = arith.constant 0 : index
    %c0_14 = arith.constant 0 : index
    %c0_15 = arith.constant 0 : index
    %30 = vector.load %arg6[%c0_13, %c0_14, %c0_15] : memref<1x32x128xf32, #tpu.memory_space<vmem>>, vector<1x32x128xf32>
    %31 = vector.shape_cast %30 : vector<1x32x128xf32> to vector<32x128xf32>
    %32 = vector.shape_cast %29 : vector<32x128xf32> to vector<1x32x128xf32>
    tpu.vector_store %arg6[%c0_13, %c0_14, %c0_15], %32 {strides = array<i32>} : memref<1x32x128xf32, #tpu.memory_space<vmem>>, vector<1x32x128xf32>,
    return
  }
  func.func @transform_0(%arg0: i32, %arg1: i32) -> i32 {
    %c0_i32 = arith.constant 0 : i32
    %c0_i32_0 = arith.constant 0 : i32
    return %c0_i32 : i32
  }
  func.func @transform_1(%arg0: i32, %arg1: i32) -> (i32, i32, i32) {
    %c0_i32 = arith.constant 0 : i32
    %c0_i32_0 = arith.constant 0 : i32
    %c0_i32_1 = arith.constant 0 : i32
    %c0_i32_2 = arith.constant 0 : i32
    return %c0_i32, %c0_i32_0, %c0_i32_1 : i32, i32, i32
  }
  func.func @transform_2(%arg0: i32, %arg1: i32) -> (i32, i32, i32) {
    %c0_i32 = arith.constant 0 : i32
    %c0_i32_0 = arith.constant 0 : i32
    return %arg0, %c0_i32, %arg1 : i32, i32, i32
  }
  func.func @transform_3(%arg0: i32, %arg1: i32) -> (i32, i32, i32) {
    %c1_i32 = arith.constant 1 : i32
    %0 = arith.addi %arg1, %c1_i32 : i32
    %c1_i32_0 = arith.constant 1 : i32
    %1 = arith.muli %0, %c1_i32_0 : i32
    %c0_i32 = arith.constant 0 : i32
    %c0_i32_1 = arith.constant 0 : i32
    return %arg0, %c0_i32, %1 : i32, i32, i32
  }
  func.func @transform_4(%arg0: i32, %arg1: i32) -> (i32, i32, i32) {
    %c0_i32 = arith.constant 0 : i32
    %c0_i32_0 = arith.constant 0 : i32
    return %arg0, %c0_i32, %arg1 : i32, i32, i32
  }
}

</mosaic_0001>

<llo_original>
// kernel: encoder_forward.1
$region0: #{encoder_forward.1}
  #allocation0 [shape = 'u32[]', space=smem, size = 0x4, offset = 0x4, fixed_abs, tag = 'smem constant byte address 0x4 - core index']
  #allocation1 [shape = 'u32[72,128]{1,0:T(1,128)}', space=vmem, size = 0x9000, scoped, tag = 'internal scratch']
  %s0 = inlined_call_operand.vmem [shape: f32[2], index: 0, kind: input, shape index: {}]
  %s1 = inlined_call_operand.vmem [shape: bf16[2,64,4], index: 1, kind: input, shape index: {}]
  %s2 = inlined_call_operand.vmem [shape: f32[2,4,256], index: 2, kind: input, shape index: {}, may-alias: {2,3}]
  %s3 = inlined_call_operand.vmem [shape: f32[2,4,256], index: 3, kind: input, shape index: {}, may-alias: {2,3}]
  %s4 = inlined_call_operand.vmem [shape: f32[2,32,128], index: 4, kind: output, shape index: {}]
  %s5 = sld [smem:[#allocation0]]
  $region53: #{encoder_forward.1} parent=0
    _
  %s7 = ssub.s32 1, %s5
  %s8 = scalar_select 0, %s7, %s5
  $region1: #{encoder_forward.1} parent=0
    #allocation2 [shape = 'u8[512]{0}', space=smem, size = 0x200, scoped, tag = 'input window, operand 0, single buffered']
    #allocation3 [shape = 's32[2]{0}', space=sflag, size = 0x8, scoped, tag = 'scoped memory for encoder_forward.1']
    %9 = vsyncpa [#allocation3], 0
    loop: start=0, step=1, limit=4
    $region2: #{encoder_forward.1} parent=1 // loop_pre_header
      _
    $region3: #{encoder_forward.1} parent=1 // loop_header
      %s11 = sphi 0, %s15
      %p12 = scmp.ge.s32.totalorder %s11, 4
      %s18 = sphi 0, %s30
      %s19 = sphi 0, %s26
      %s20 = sphi 0, %s18
      %s21 = sphi 0, %s19
      %s22 = sphi 0, %s20
      %s23 = sphi 0, %s21
      %s31 = sphi 0, %s31
      %s33 = sphi 0, %s31
      %s34 = sphi 0, %s33
      %s48 = sphi 0, %s34
      %s52 = sphi 0, %s52
      %s54 = sphi 0, %s52
      %s55 = sphi 0, %s54
      %s69 = sphi 0, %s55
      %s77 = sphi 0, %s79
      %s80 = sphi 0, %s77
      %s81 = sphi 0, %s80
      %s97 = sphi 0, %s81
      %s107 = sphi 0, %s109
      %s110 = sphi 0, %s107
      %s111 = sphi 0, %s110
      %s127 = sphi 0, %s111
      %s135 = sphi 0, %s137
      %s138 = sphi 0, %s135
      %s139 = sphi 0, %s138
      %s155 = sphi 0, %s139
    $region4: #{encoder_forward.1} parent=1 // loop_header_branch
      %14 = sbr.rel (%p12) target = $region8
    $region5: #{encoder_forward.1} parent=1 // loop_body
      %s16 = ssub.s32 %s11, 1
      %s17 = ssub.s32 %s11, 2
      %s24 = sadd.s32 1, %s19
      %p25 = scmp.ge.s32.totalorder %s24, 1
      %s26 = scalar_select %p25, 0, %s24
      %s27 = sadd.s32 1, %s18
      %s28 = scalar_select %p25, %s27, %s18
      %p29 = scmp.ge.s32.totalorder %s28, 2
      %s30 = scalar_select %p29, 0, %s28
      %s32 = sadd.s32 %s31, 1
      %p35 = scmp.eq.s32.totalorder %s11, 1
      %p36 = scmp.ne.s32.totalorder %s31, %s33
      %p37 = scmp.eq.s32.totalorder %s11, 0
      %p38 = por %p36, %p37
      %p39 = scmp.ne.s32.totalorder %s31, %s33
      %p40 = scmp.eq.s32.totalorder %s16, 1
      %p41 = por %p39, %p40
      %p42 = scmp.ne.s32.totalorder %s33, %s34
      %p43 = scmp.eq.s32.totalorder %s16, 0
      %p44 = por %p42, %p43
      %p45 = scmp.ne.s32.totalorder %s33, %s34
      %p46 = scmp.eq.s32.totalorder %s17, 1
      %p47 = por %p45, %p46
      %p49 = scmp.ne.s32.totalorder %s34, %s48
      %p50 = scmp.eq.s32.totalorder %s17, 0
      %p51 = por %p49, %p50
      %s53 = sadd.s32 %s52, 1
      %p56 = scmp.eq.s32.totalorder %s11, 1
      %p57 = scmp.ne.s32.totalorder %s52, %s54
      %p58 = scmp.eq.s32.totalorder %s11, 0
      %p59 = por %p57, %p58
      %p60 = scmp.ne.s32.totalorder %s52, %s54
      %p61 = scmp.eq.s32.totalorder %s16, 1
      %p62 = por %p60, %p61
      %p63 = scmp.ne.s32.totalorder %s54, %s55
      %p64 = scmp.eq.s32.totalorder %s16, 0
      %p65 = por %p63, %p64
      %p66 = scmp.ne.s32.totalorder %s54, %s55
      %p67 = scmp.eq.s32.totalorder %s17, 1
      %p68 = por %p66, %p67
      %p70 = scmp.ne.s32.totalorder %s55, %s69
      %p71 = scmp.eq.s32.totalorder %s17, 0
      %p72 = por %p70, %p71
      %s73 = ssub.s32 %s18, %s30
      %s74 = ssub.s32 %s19, %s26
      %s75 = sor.u32 %s73, %s74
      %p76 = scmp.eq.s32.totalorder %s75, 0
      %s78 = sadd.s32 %s77, 1
      %s79 = scalar_select %p76, %s77, %s78
      %p82 = pneg %p76
      %p83 = scmp.eq.s32.totalorder %s11, 1
      %p84 = por %p82, %p83
      %p85 = scmp.ne.s32.totalorder %s77, %s80
      %p86 = scmp.eq.s32.totalorder %s11, 0
      %p87 = por %p85, %p86
      %p88 = scmp.ne.s32.totalorder %s77, %s80
      %p89 = scmp.eq.s32.totalorder %s16, 1
      %p90 = por %p88, %p89
      %p91 = scmp.ne.s32.totalorder %s80, %s81
      %p92 = scmp.eq.s32.totalorder %s16, 0
      %p93 = por %p91, %p92
      %p94 = scmp.ne.s32.totalorder %s80, %s81
      %p95 = scmp.eq.s32.totalorder %s17, 1
      %p96 = por %p94, %p95
      %p98 = scmp.ne.s32.totalorder %s81, %s97
      %p99 = scmp.eq.s32.totalorder %s17, 0
      %p100 = por %p98, %p99
      %s101 = sadd.s32 %s19, 1
      %s102 = sadd.s32 %s26, 1
      %s103 = ssub.s32 %s18, %s30
      %s104 = ssub.s32 %s101, %s102
      %s105 = sor.u32 %s103, %s104
      %p106 = scmp.eq.s32.totalorder %s105, 0
      %s108 = sadd.s32 %s107, 1
      %s109 = scalar_select %p106, %s107, %s108
      %p112 = pneg %p106
      %p113 = scmp.eq.s32.totalorder %s11, 1
      %p114 = por %p112, %p113
      %p115 = scmp.ne.s32.totalorder %s107, %s110
      %p116 = scmp.eq.s32.totalorder %s11, 0
      %p117 = por %p115, %p116
      %p118 = scmp.ne.s32.totalorder %s107, %s110
      %p119 = scmp.eq.s32.totalorder %s16, 1
      %p120 = por %p118, %p119
      %p121 = scmp.ne.s32.totalorder %s110, %s111
      %p122 = scmp.eq.s32.totalorder %s16, 0
      %p123 = por %p121, %p122
      %p124 = scmp.ne.s32.totalorder %s110, %s111
      %p125 = scmp.eq.s32.totalorder %s17, 1
      %p126 = por %p124, %p125
      %p128 = scmp.ne.s32.totalorder %s111, %s127
      %p129 = scmp.eq.s32.totalorder %s17, 0
      %p130 = por %p128, %p129
      %s131 = ssub.s32 %s18, %s30
      %s132 = ssub.s32 %s19, %s26
      %s133 = sor.u32 %s131, %s132
      %p134 = scmp.eq.s32.totalorder %s133, 0
      %s136 = sadd.s32 %s135, 1
      %s137 = scalar_select %p134, %s135, %s136
      %p140 = pneg %p134
      %p141 = scmp.eq.s32.totalorder %s11, 1
      %p142 = por %p140, %p141
      %p143 = scmp.ne.s32.totalorder %s135, %s138
      %p144 = scmp.eq.s32.totalorder %s11, 0
      %p145 = por %p143, %p144
      %p146 = scmp.ne.s32.totalorder %s135, %s138
      %p147 = scmp.eq.s32.totalorder %s16, 1
      %p148 = por %p146, %p147
      %p149 = scmp.ne.s32.totalorder %s138, %s139
      %p150 = scmp.eq.s32.totalorder %s16, 0
      %p151 = por %p149, %p150
      %p152 = scmp.ne.s32.totalorder %s138, %s139
      %p153 = scmp.eq.s32.totalorder %s17, 1
      %p154 = por %p152, %p153
      %p156 = scmp.ne.s32.totalorder %s139, %s155
      %p157 = scmp.eq.s32.totalorder %s17, 0
      %p158 = por %p156, %p157
      %p159 = scmp.le.s32.totalorder 1, %s11
      %p160 = scmp.lt.s32.totalorder %s11, 3
      %p161 = pnand %p159, %p160
      %p162 = pneg %p161
      // Predicated region
      $region9: #{encoder_forward.1} parent=5 // pred_check
        _
      $region10: #{encoder_forward.1} parent=5 // pred_check_branch
        %164 = sbr.rel (%p161) target = $region12
      $region11: #{encoder_forward.1} parent=5 // pred_region
        %s165 = ssub.s32 %s11, 1
        // Predicated region
        $region13: #{encoder_forward.1} parent=11 // pred_check
          %p166 = pneg %p44
        $region14: #{encoder_forward.1} parent=11 // pred_check_branch
          %168 = sbr.rel (%p166) target = $region16
        $region15: #{encoder_forward.1} parent=11 // pred_region
          %170 = vsyncadd [#allocation3], 0
          %s172 = sshll.u32 %s0, 4
          %s173 = int_to_ptr.vmem [resolvable:$true] %s172
          %175 = dma.vmem_to_smem %s173, 16, [#allocation2], [#allocation3]
        $region16: #{encoder_forward.1} parent=11 // pred_fallthru
          _
        // Predicated region
        $region17: #{encoder_forward.1} parent=11 // pred_check
          %p176 = pneg %p65
        $region18: #{encoder_forward.1} parent=11 // pred_check_branch
          %178 = sbr.rel (%p176) target = $region20
        $region19: #{encoder_forward.1} parent=11 // pred_region
          _
        $region20: #{encoder_forward.1} parent=11 // pred_fallthru
          _
      $region12: #{encoder_forward.1} parent=5 // pred_fallthru
        _
      %p179 = scmp.lt.s32.totalorder %s11, 2
      // Predicated region
      $region21: #{encoder_forward.1} parent=5 // pred_check
        %p180 = pneg %p179
      $region22: #{encoder_forward.1} parent=5 // pred_check_branch
        %182 = sbr.rel (%p180) target = $region24
      $region23: #{encoder_forward.1} parent=5 // pred_region
        // Predicated region
        $region25: #{encoder_forward.1} parent=23 // pred_check
          %p183 = pneg %p87
        $region26: #{encoder_forward.1} parent=23 // pred_check_branch
          %185 = sbr.rel (%p183) target = $region28
        $region27: #{encoder_forward.1} parent=23 // pred_region
          %p186 = scmp.lt.s32.totalorder %s18, 1
          %s187 = scalar_select %p186, %s18, 1
          %p188 = scmp.lt.s32.totalorder %s19, 1
          %s189 = scalar_select %p188, %s19, 1
          %s190 = smul.addr %s187, 2
          %s191 = sadd.s32 %s189, %s190
          %s192 = smul.addr %s191, 4
          %s193 = scalar_lea.vmem %s2, %s192
        $region28: #{encoder_forward.1} parent=23 // pred_fallthru
          _
        // Predicated region
        $region29: #{encoder_forward.1} parent=23 // pred_check
          %p194 = pneg %p117
        $region30: #{encoder_forward.1} parent=23 // pred_check_branch
          %196 = sbr.rel (%p194) target = $region32
        $region31: #{encoder_forward.1} parent=23 // pred_region
          %s197 = sadd.s32 %s19, 1
          %p198 = scmp.lt.s32.totalorder %s18, 1
          %s199 = scalar_select %p198, %s18, 1
          %p200 = scmp.lt.s32.totalorder %s197, 1
          %s201 = scalar_select %p200, %s197, 1
          %s202 = smul.addr %s199, 2
          %s203 = sadd.s32 %s201, %s202
          %s204 = smul.addr %s203, 4
          %s205 = scalar_lea.vmem %s3, %s204
          %s206 = sadd.s32 %s19, 1
        $region32: #{encoder_forward.1} parent=23 // pred_fallthru
          _
      $region24: #{encoder_forward.1} parent=5 // pred_fallthru
        _
      %p207 = scmp.le.s32.totalorder 1, %s11
      %p208 = scmp.lt.s32.totalorder %s11, 3
      %p209 = pnand %p207, %p208
      %p210 = pneg %p209
      // Predicated region
      $region33: #{encoder_forward.1} parent=5 // pred_check
        _
      $region34: #{encoder_forward.1} parent=5 // pred_check_branch
        %212 = sbr.rel (%p209) target = $region36
      $region35: #{encoder_forward.1} parent=5 // pred_region
        %s213 = ssub.s32 %s11, 1
        // Predicated region
        $region37: #{encoder_forward.1} parent=35 // pred_check
          %p214 = pneg %p44
        $region38: #{encoder_forward.1} parent=35 // pred_check_branch
          %216 = sbr.rel (%p214) target = $region40
        $region39: #{encoder_forward.1} parent=35 // pred_region
          %218 = dma.done [#allocation3], 16
        $region40: #{encoder_forward.1} parent=35 // pred_fallthru
          _
        %219 = sfence
        %p220 = pneg %p44
        %p221 = pneg %p41
        %p222 = pneg %p65
        %p223 = pneg %p62
        %p224 = scmp.lt.s32.totalorder %s20, 1
        %s225 = scalar_select %p224, %s20, 1
        %p226 = scmp.lt.s32.totalorder %s21, 1
        %s227 = scalar_select %p226, %s21, 1
        %s228 = smul.addr %s225, 2
        %s229 = sadd.s32 %s227, %s228
        %s230 = smul.addr %s229, 4
        %s231 = scalar_lea.vmem %s2, %s230
        %p232 = pneg %p93
        %p233 = pneg %p90
        %s234 = sadd.s32 %s21, 1
        %p235 = scmp.lt.s32.totalorder %s20, 1
        %s236 = scalar_select %p235, %s20, 1
        %p237 = scmp.lt.s32.totalorder %s234, 1
        %s238 = scalar_select %p237, %s234, 1
        %s239 = smul.addr %s236, 2
        %s240 = sadd.s32 %s238, %s239
        %s241 = smul.addr %s240, 4
        %s242 = scalar_lea.vmem %s3, %s241
        %p243 = pneg %p123
        %p244 = pneg %p120
        %p245 = pneg %p151
        %p246 = pneg %p148
        %p247 = scmp.lt.s32.totalorder %s20, 1
        %s248 = scalar_select %p247, %s20, 1
        %p249 = scmp.lt.s32.totalorder %s21, 0
        %s250 = scalar_select %p249, %s21, 0
        %s251 = smul.addr %s248, 4
        %s252 = sadd.s32 %s250, %s251
        %s253 = smul.addr %s252, 8
        %s254 = scalar_lea.vmem %s4, %s253
        %p255 = scmp.lt.s32.totalorder %s20, 1
        %s256 = scalar_select %p255, %s20, 1
        %p257 = scmp.lt.s32.totalorder %s21, 1
        %s258 = scalar_select %p257, %s21, 1
        %s259 = smul.addr %s256, 2
        %s260 = sadd.s32 %s258, %s259
        %s261 = smul.addr %s260, 4
        %s262 = scalar_lea.vmem %s2, %s261
        %s263 = sadd.s32 %s21, 1
        %p264 = scmp.lt.s32.totalorder %s20, 1
        %s265 = scalar_select %p264, %s20, 1
        %p266 = scmp.lt.s32.totalorder %s263, 1
        %s267 = scalar_select %p266, %s263, 1
        %s268 = smul.addr %s265, 2
        %s269 = sadd.s32 %s267, %s268
        %s270 = smul.addr %s269, 4
        %s271 = scalar_lea.vmem %s3, %s270
        %s272 = sadd.s32 %s21, 1
        %p273 = scmp.lt.s32.totalorder %s20, 1
        %s274 = scalar_select %p273, %s20, 1
        %p275 = scmp.lt.s32.totalorder %s21, 0
        %s276 = scalar_select %p275, %s21, 0
        %s277 = smul.addr %s274, 4
        %s278 = sadd.s32 %s276, %s277
        %s279 = smul.addr %s278, 8
        %s280 = scalar_lea.vmem %s4, %s279
        %s282 = sld [smem:[#allocation2 + %s20]]
        %v283 = vld [vmem:[%s262] sm:$0xf]
        %v284 = vld [vmem:[%s271] sm:$0xf]
        %v285 = vstv %s282
        %v286 = vmul.f32 %v283, %v285
        %v287 = vmul.f32 %v284, %v285
        %v288 = vld [vmem:[%s1] sm:$0xf]
        %v289 = vld [vmem:[%s1 + $0x4] sm:$0xf]
        %v290 = vld [vmem:[%s1 + $0x8] sm:$0xf]
        %v291 = vld [vmem:[%s1 + $0xc] sm:$0xf]
        %v292 = vld [vmem:[%s1 + $0x10] sm:$0xf]
        %v293 = vld [vmem:[%s1 + $0x14] sm:$0xf]
        %v294 = vld [vmem:[%s1 + $0x18] sm:$0xf]
        %v295 = vld [vmem:[%s1 + $0x1c] sm:$0xf]
        %v296 = vpack.c.bf16 %v286, %v286
        %s297 = scalar_lea.vmem %s1, 32
        %v298 = vld [vmem:[%s297] sm:$0xf]
        %v299 = vld [vmem:[%s297 + $0x4] sm:$0xf]
        %v300 = vld [vmem:[%s297 + $0x8] sm:$0xf]
        %v301 = vld [vmem:[%s297 + $0xc] sm:$0xf]
        %v302 = vld [vmem:[%s297 + $0x10] sm:$0xf]
        %v303 = vld [vmem:[%s297 + $0x14] sm:$0xf]
        %v304 = vld [vmem:[%s297 + $0x18] sm:$0xf]
        %v305 = vld [vmem:[%s297 + $0x1c] sm:$0xf]
        %v306 = vpack.c.bf16 %v287, %v287
        %v315 = vunpack.c.l.b16 %v298
        %v316 = vunpack.c.l.b16 %v299
        %v317 = vunpack.c.l.b16 %v300
        %v318 = vunpack.c.l.b16 %v301
        %v319 = vunpack.c.l.b16 %v302
        %v320 = vunpack.c.l.b16 %v303
        %v321 = vunpack.c.l.b16 %v304
        %v322 = vunpack.c.l.b16 %v305
        %v323 = vpack.c.b16 %v316, %v315
        %v324 = vpack.c.b16 %v318, %v317
        %v325 = vpack.c.b16 %v320, %v319
        %v326 = vpack.c.b16 %v322, %v321
        %329 = vrot.lane.b32.xlu0 %v296, 127
        %v330 = vpop.permute.xlu0 %329
        %331 = vrot.lane.b32.xlu0 %v306, 127
        %v332 = vpop.permute.xlu0 %331
        %vm333 = vcmask 1039360
        %v334 = vsel %vm333, %v330, %v332
        %vm335 = vcmask 31744
        %v337 = vsel %vm335, %v323, 0
        %v340 = vsel %vm335, %v324, 0
        %v343 = vsel %vm335, %v325, 0
        %v346 = vsel %vm335, %v326, 0
        %vm348 = vcmask 1041408
        %v350 = vsel %vm348, %v334, 0
        %352 = vmatpush.bf16.msra.mxu0 0
        %353 = vmatpush.bf16.msra.mxu0 0
        %354 = vmatpush.bf16.msra.mxu0 0
        %355 = vmatpush.bf16.msra.mxu0 0
        %356 = vmatpush.bf16.msra.mxu0 0
        %357 = vmatpush.bf16.msra.mxu0 0
        %358 = vmatpush.bf16.msra.mxu0 0
        %359 = vmatpush.bf16.msra.mxu0 %v350
        %360 = vmatmul.bf16.gmra.mxu0 %v337
        %v361 = vpop.f32.mrf.mxu0
        %v362 = vadd.f32 0.0, %v361
        %v363 = vpop.f32.mrf.mxu0
        %v364 = vadd.f32 0.0, %v363
        %365 = vmatmul.bf16.gmra.mxu0 %v340
        %v366 = vpop.f32.mrf.mxu0
        %v367 = vadd.f32 0.0, %v366
        %v368 = vpop.f32.mrf.mxu0
        %v369 = vadd.f32 0.0, %v368
        %370 = vmatmul.bf16.gmra.mxu0 %v343
        %v371 = vpop.f32.mrf.mxu0
        %v372 = vadd.f32 0.0, %v371
        %v373 = vpop.f32.mrf.mxu0
        %v374 = vadd.f32 0.0, %v373
        %375 = vmatmul.bf16.gmra.mxu0 %v346
        %v376 = vpop.f32.mrf.mxu0
        %v377 = vadd.f32 0.0, %v376
        %v378 = vpop.f32.mrf.mxu0
        %v379 = vadd.f32 0.0, %v378
        %380 = vdwg.mxu0
        %v389 = vunpack.c.l.b16 %v288
        %v390 = vunpack.c.l.b16 %v289
        %v391 = vunpack.c.l.b16 %v290
        %v392 = vunpack.c.l.b16 %v291
        %v393 = vunpack.c.l.b16 %v292
        %v394 = vunpack.c.l.b16 %v293
        %v395 = vunpack.c.l.b16 %v294
        %v396 = vunpack.c.l.b16 %v295
        %v397 = vpack.c.b16 %v390, %v389
        %v398 = vpack.c.b16 %v392, %v391
        %v399 = vpack.c.b16 %v394, %v393
        %v400 = vpack.c.b16 %v396, %v395
        %v402 = vsel %vm335, %v397, 0
        %v405 = vsel %vm335, %v398, 0
        %v408 = vsel %vm335, %v399, 0
        %v411 = vsel %vm335, %v400, 0
        %v414 = vsel %vm348, %v296, 0
        %416 = vmatpush.bf16.msra.mxu0 0
        %417 = vmatpush.bf16.msra.mxu0 0
        %418 = vmatpush.bf16.msra.mxu0 0
        %419 = vmatpush.bf16.msra.mxu0 0
        %420 = vmatpush.bf16.msra.mxu0 0
        %421 = vmatpush.bf16.msra.mxu0 0
        %422 = vmatpush.bf16.msra.mxu0 0
        %423 = vmatpush.bf16.msra.mxu0 %v414
        %424 = vmatmul.bf16.gmra.mxu0 %v402
        %v425 = vpop.f32.mrf.mxu0
        %v426 = vadd.f32 %v362, %v425
        %v427 = vpop.f32.mrf.mxu0
        %v428 = vadd.f32 %v364, %v427
        %429 = vmatmul.bf16.gmra.mxu0 %v405
        %v430 = vpop.f32.mrf.mxu0
        %v431 = vadd.f32 %v367, %v430
        %v432 = vpop.f32.mrf.mxu0
        %v433 = vadd.f32 %v369, %v432
        %434 = vmatmul.bf16.gmra.mxu0 %v408
        %v435 = vpop.f32.mrf.mxu0
        %v436 = vadd.f32 %v372, %v435
        %v437 = vpop.f32.mrf.mxu0
        %v438 = vadd.f32 %v374, %v437
        %439 = vmatmul.bf16.gmra.mxu0 %v411
        %v440 = vpop.f32.mrf.mxu0
        %v441 = vadd.f32 %v377, %v440
        %v442 = vpop.f32.mrf.mxu0
        %v443 = vadd.f32 %v379, %v442
        %444 = vdwg.mxu0
        %v445 = vmax.f32 %v426, 0.0
        %v446 = vmax.f32 %v428, 0.0
        %v447 = vmax.f32 %v431, 0.0
        %v448 = vmax.f32 %v433, 0.0
        %v449 = vxor.u32 %v436, 2147483648
        %v450 = vxor.u32 %v438, 2147483648
        %v451 = vxor.u32 %v441, 2147483648
        %v452 = vxor.u32 %v443, 2147483648
        %v453 = vmul.f32 %v449, 1.442695
        %v454 = vpow.pop %v453
        %v455 = vmul.f32 %v450, 1.442695
        %v456 = vpow.pop %v455
        %v457 = vmul.f32 %v451, 1.442695
        %v458 = vpow.pop %v457
        %v459 = vmul.f32 %v452, 1.442695
        %v460 = vpow.pop %v459
        %v461 = vadd.f32 %v454, 1.0
        %v462 = vadd.f32 %v456, 1.0
        %v463 = vadd.f32 %v458, 1.0
        %v464 = vadd.f32 %v460, 1.0
        %v465 = vrcp.pop %v461
        %v466 = vmul.f32 %v461, %v465
        %v467 = vsub.f32 1.0, %v466
        %v468 = vmul.f32 %v465, %v467
        %v469 = vadd.f32 %v465, %v468
        %vm470 = vweird.f32 %v461
        %vm471 = vweird.f32 %v465
        %vm472 = vmor %vm470, %vm471
        %v473 = vsel %vm472, %v465, %v469
        %v474 = vand.u32 2147483647, %v461
        %vm475 = vcmp.eq.f32.partialorder %v474, 8.507059e+37
        %v476 = vand.u32 %v461, 2147483648
        %v477 = vor.u32 1.1754944e-38, %v476
        %v478 = vsel %vm475, %v477, %v473
        %v479 = vmul.f32 1.0, %v478
        %v480 = vrcp.pop %v462
        %v481 = vmul.f32 %v462, %v480
        %v482 = vsub.f32 1.0, %v481
        %v483 = vmul.f32 %v480, %v482
        %v484 = vadd.f32 %v480, %v483
        %vm485 = vweird.f32 %v462
        %vm486 = vweird.f32 %v480
        %vm487 = vmor %vm485, %vm486
        %v488 = vsel %vm487, %v480, %v484
        %v489 = vand.u32 2147483647, %v462
        %vm490 = vcmp.eq.f32.partialorder %v489, 8.507059e+37
        %v491 = vand.u32 %v462, 2147483648
        %v492 = vor.u32 1.1754944e-38, %v491
        %v493 = vsel %vm490, %v492, %v488
        %v494 = vmul.f32 1.0, %v493
        %v495 = vrcp.pop %v463
        %v496 = vmul.f32 %v463, %v495
        %v497 = vsub.f32 1.0, %v496
        %v498 = vmul.f32 %v495, %v497
        %v499 = vadd.f32 %v495, %v498
        %vm500 = vweird.f32 %v463
        %vm501 = vweird.f32 %v495
        %vm502 = vmor %vm500, %vm501
        %v503 = vsel %vm502, %v495, %v499
        %v504 = vand.u32 2147483647, %v463
        %vm505 = vcmp.eq.f32.partialorder %v504, 8.507059e+37
        %v506 = vand.u32 %v463, 2147483648
        %v507 = vor.u32 1.1754944e-38, %v506
        %v508 = vsel %vm505, %v507, %v503
        %v509 = vmul.f32 1.0, %v508
        %v510 = vrcp.pop %v464
        %v511 = vmul.f32 %v464, %v510
        %v512 = vsub.f32 1.0, %v511
        %v513 = vmul.f32 %v510, %v512
        %v514 = vadd.f32 %v510, %v513
        %vm515 = vweird.f32 %v464
        %vm516 = vweird.f32 %v510
        %vm517 = vmor %vm515, %vm516
        %v518 = vsel %vm517, %v510, %v514
        %v519 = vand.u32 2147483647, %v464
        %vm520 = vcmp.eq.f32.partialorder %v519, 8.507059e+37
        %v521 = vand.u32 %v464, 2147483648
        %v522 = vor.u32 1.1754944e-38, %v521
        %v523 = vsel %vm520, %v522, %v518
        %v524 = vmul.f32 1.0, %v523
        %v525 = vmul.f32 %v445, %v479
        %v526 = vmul.f32 %v446, %v494
        %v527 = vmul.f32 %v447, %v509
        %v528 = vmul.f32 %v448, %v524
        %529 = vst [vmem:[%s280] sm:$0xff] %v525
        %530 = vst [vmem:[%s280 + $0x8] sm:$0xff] %v526
        %531 = vst [vmem:[%s280 + $0x10] sm:$0xff] %v527
        %532 = vst [vmem:[%s280 + $0x18] sm:$0xff] %v528
        %p533 = scmp.lt.s32.totalorder %s20, 1
        %s534 = scalar_select %p533, %s20, 1
        %p535 = scmp.lt.s32.totalorder %s21, 0
        %s536 = scalar_select %p535, %s21, 0
        %s537 = smul.addr %s534, 4
        %s538 = sadd.s32 %s536, %s537
        %s539 = smul.addr %s538, 8
        %s540 = scalar_lea.vmem %s4, %s539
        // Predicated region
        $region41: #{encoder_forward.1} parent=35 // pred_check
          %p541 = pneg %p148
        $region42: #{encoder_forward.1} parent=35 // pred_check_branch
          %543 = sbr.rel (%p541) target = $region44
        $region43: #{encoder_forward.1} parent=35 // pred_region
          _
        $region44: #{encoder_forward.1} parent=35 // pred_fallthru
          _
      $region36: #{encoder_forward.1} parent=5 // pred_fallthru
        _
      %p544 = scmp.le.s32.totalorder 2, %s11
      // Predicated region
      $region45: #{encoder_forward.1} parent=5 // pred_check
        %p545 = pneg %p544
      $region46: #{encoder_forward.1} parent=5 // pred_check_branch
        %547 = sbr.rel (%p545) target = $region48
      $region47: #{encoder_forward.1} parent=5 // pred_region
        %s548 = ssub.s32 %s11, 2
        // Predicated region
        $region49: #{encoder_forward.1} parent=47 // pred_check
          %p549 = pneg %p154
        $region50: #{encoder_forward.1} parent=47 // pred_check_branch
          %551 = sbr.rel (%p549) target = $region52
        $region51: #{encoder_forward.1} parent=47 // pred_region
          %p552 = scmp.lt.s32.totalorder %s22, 1
          %s553 = scalar_select %p552, %s22, 1
          %p554 = scmp.lt.s32.totalorder %s23, 0
          %s555 = scalar_select %p554, %s23, 0
          %s556 = smul.addr %s553, 4
          %s557 = sadd.s32 %s555, %s556
          %s558 = smul.addr %s557, 8
          %s559 = scalar_lea.vmem %s4, %s558
        $region52: #{encoder_forward.1} parent=47 // pred_fallthru
          _
      $region48: #{encoder_forward.1} parent=5 // pred_fallthru
        _
    $region6: #{encoder_forward.1} parent=1 // loop_footer
      %s15 = sadd.s32 1, %s11
    $region7: #{encoder_forward.1} parent=1 // loop_footer_branch
      %10 = sbr.rel target = $region3
    $region8: #{encoder_forward.1} parent=1 // loop_exit
      _
    %560 = vsyncpa [#allocation3], 1
    %s561 = scalar_lea.sflag [#allocation3], 1
    %562 = vsyncpa %s561, 1

</llo_original>
